<compile_context>
chip_gen: v5e
topology: v5e:2x2
jax: 0.10.0
libtpu: 0.0.40
codegen_flags: <defaults>
</compile_context>

<pallas_src>
import math
import random
from functools import lru_cache

import numpy as np
import jax
import jax.numpy as jnp
from jax.experimental import pallas as pl
from jax.experimental.pallas import tpu as pltpu

_LANE = 128
_SUBLANE = 8
_MAX_U_TILE = 2048   # safe on v7x (bf16); v5e/v6e could go 4096


def _round_up(x, m):
    return ((x + m - 1) // m) * m


def _next_pow2(x):
    return 1 << (max(int(x), 1) - 1).bit_length()


def _batch_tiling(b):
    """Bucketed padded batch size and batch tile (tb | b_pad, >=2-4 grid steps
    once the batch is big enough; tb capped at 256 = MXU M-cadence)."""
    b = int(b)
    if b <= 1024:
        b_pad = max(_SUBLANE, _next_pow2(b))
        tb = max(_SUBLANE, min(256, b_pad // 4))
        return b_pad, tb
    tb = 256
    return _round_up(b, tb), tb


def _u_tiling(u):
    """Bucketed padded unique-neighbor count and U tile (tu | u_pad)."""
    u = int(u)
    if u <= _MAX_U_TILE:
        u_pad = max(_LANE, _next_pow2(u))
        return u_pad, u_pad
    tu = _MAX_U_TILE
    return _round_up(u, tu), tu


@lru_cache(maxsize=None)
def _vmem_limit_bytes():
    # ~3/4 of physical VMEM: ~48 MiB on v7x (64 MiB), ~96 MiB on v5e/v6e (128 MiB).
    try:
        cap = int(pltpu.get_tpu_info().vmem_capacity_bytes)
    except Exception:
        cap = 64 << 20
    return (cap * 3) // 4


# ----------------------------------------------------------------------------
# Fused Pallas kernel: MEAN aggregation (U-tiled) + SageLayer affine + relu6
# ----------------------------------------------------------------------------
def _fused_sage_kernel(mask_ref, embed_ref, self_ref, nn_ref, w_self_ref,
                       w_agg_ref, out_ref, acc_ref):
    """Per batch tile:
         acc += mask[:, k-tile] @ embed[k-tile, :]        (bf16 MXU, f32 acc)
       last k step:
         agg  = acc * 1/num_neigh   (0.5 where neighbourhood empty — matches
                                     torch's 0/0 -> NaN -> 0.5 replacement)
         out  = relu6(self @ W_self + agg @ W_agg)        (bf16 MXU, f32 acc)
    """
    k = pl.program_id(1)

    @pl.when(k == 0)
    def _():
        acc_ref[...] = jnp.zeros_like(acc_ref)

    acc_ref[...] += jnp.dot(mask_ref[...], embed_ref[...],
                            preferred_element_type=jnp.float32)

    @pl.when(k == pl.num_programs(1) - 1)
    def _():
        nn = nn_ref[...]                                          # [TB, 1] f32
        inv = pl.reciprocal(jnp.maximum(nn, 1.0), approx=True)    # EUP slot
        agg = jnp.where(nn > 0.0, acc_ref[...] * inv, jnp.float32(0.5))
        z = jnp.dot(self_ref[...], w_self_ref[...],
                    preferred_element_type=jnp.float32)
        z = z + jnp.dot(agg.astype(jnp.bfloat16), w_agg_ref[...],
                        preferred_element_type=jnp.float32)
        out_ref[...] = jnp.minimum(jnp.maximum(z, 0.0), 6.0)      # relu6


@lru_cache(maxsize=None)
def _build_fused_sage_call(b_pad, tb, u_pad, tu, d_pad, o_pad):
    """Build (once per shape bucket) the jitted pallas_call for one layer."""
    grid = (b_pad // tb, u_pad // tu)

    def make(weight_pipeline_mode):
        wkw = ({} if weight_pipeline_mode is None
               else dict(pipeline_mode=weight_pipeline_mode))
        in_specs = [
            pl.BlockSpec((tb, tu), lambda i, k: (i, k)),          # mask   (bf16)
            pl.BlockSpec((tu, d_pad), lambda i, k: (k, 0)),       # embed  (bf16)
            pl.BlockSpec((tb, d_pad), lambda i, k: (i, 0)),       # self   (bf16)
            pl.BlockSpec((tb, 1), lambda i, k: (i, 0)),           # num_neigh (f32)
            pl.BlockSpec((d_pad, o_pad), lambda i, k: (0, 0), **wkw),  # W_self^T
            pl.BlockSpec((d_pad, o_pad), lambda i, k: (0, 0), **wkw),  # W_agg^T
        ]
        return pl.pallas_call(
            _fused_sage_kernel,
            out_shape=jax.ShapeDtypeStruct((b_pad, o_pad), jnp.float32),
            grid=grid,
            in_specs=in_specs,
            out_specs=pl.BlockSpec((tb, o_pad), lambda i, k: (i, 0)),
            scratch_shapes=[pltpu.VMEM((tb, d_pad), jnp.float32)],
            compiler_params=pltpu.CompilerParams(
                dimension_semantics=("parallel", "arbitrary"),
                vmem_limit_bytes=_vmem_limit_bytes()),
        )

    abstract_args = (
        jax.ShapeDtypeStruct((b_pad, u_pad), jnp.bfloat16),
        jax.ShapeDtypeStruct((u_pad, d_pad), jnp.bfloat16),
        jax.ShapeDtypeStruct((b_pad, d_pad), jnp.bfloat16),
        jax.ShapeDtypeStruct((b_pad, 1), jnp.float32),
        jax.ShapeDtypeStruct((d_pad, o_pad), jnp.bfloat16),
        jax.ShapeDtypeStruct((d_pad, o_pad), jnp.bfloat16),
    )
    # Feature-detect pipeline_mode=Buffered(1) on the grid-invariant weights
    # (VMEM saver on v7x); fall back to default buffering if unsupported.
    try:
        call = make(pl.Buffered(1))
        jax.jit(call).lower(*abstract_args)
    except Exception:
        call = make(None)
    return jax.jit(call)


def fused_sage_layer(mask_bf, embed_bf, self_bf, num_neigh, w_self, w_agg,
                     tb, tu):
    b_pad, u_pad = mask_bf.shape
    d_pad = self_bf.shape[1]
    o_pad = w_self.shape[1]
    call = _build_fused_sage_call(b_pad, tb, u_pad, tu, d_pad, o_pad)
    return call(mask_bf, embed_bf, self_bf, num_neigh, w_self, w_agg)


# ----------------------------------------------------------------------------
# GraphSage module (host-side glue: sampling, set logic, mask construction)
# ----------------------------------------------------------------------------
class GraphSage:
    def __init__(self, num_layers, input_size, out_size, raw_features,
                 adj_lists, gcn=False, agg_func='MEAN'):
        assert agg_func == 'MEAN'
        # TODO(synk): gcn=True path (no concat, keep self-loop) not implemented.
        assert not gcn
        self.input_size = input_size
        self.out_size = out_size
        self.num_layers = num_layers
        self.gcn = gcn
        self.agg_func = agg_func
        self.raw_features = raw_features
        self.adj_lists = adj_lists

        self._in_pad = _round_up(input_size, _LANE)
        self._out_pad = _round_up(out_size, _LANE)
        # Lane-padded copy of the raw features (padded cols are exactly 0).
        self._raw_padded = jnp.pad(
            raw_features.astype(jnp.float32),
            ((0, 0), (0, self._in_pad - input_size)))

        # Deterministic Xavier-uniform init of the SageLayer weights
        # (PyTorch shape: [out_size, 2*layer_size] since gcn=False).
        # The kernel-side weights (split / transposed / zero-padded / bf16)
        # are built HERE, once, instead of per forward() call.
        key = jax.random.PRNGKey(1234)
        self.weights = {}
        self._w_self = {}
        self._w_agg = {}
        for index in range(1, num_layers + 1):
            layer_size = out_size if index != 1 else input_size
            in_dim = 2 * layer_size
            key, sub = jax.random.split(key)
            bound = math.sqrt(6.0 / (in_dim + out_size))
            w = jax.random.uniform(sub, (out_size, in_dim), jnp.float32,
                                   -bound, bound)
            self.weights[index] = w          # PyTorch-layout f32 reference copy
            d = layer_size
            d_pad = _round_up(d, _LANE)
            w_self = jnp.zeros((d_pad, self._out_pad), jnp.float32)
            w_self = w_self.at[:d, :out_size].set(jnp.transpose(w[:, :d]))
            w_agg = jnp.zeros((d_pad, self._out_pad), jnp.float32)
            w_agg = w_agg.at[:d, :out_size].set(jnp.transpose(w[:, d:]))
            # NOTE: with out_size=32, 75% of the padded N lanes are zero — if
            # model dims are negotiable, out_size in multiples of 128/256 uses
            # the MXU far better (see review item on v6e/v7x N-utilization).
            self._w_self[index] = w_self.astype(jnp.bfloat16)
            self._w_agg[index] = w_agg.astype(jnp.bfloat16)

    # -- neighbor sampling (pure Python / set logic, no Pallas equivalent) ----
    def _get_unique_neighs_list(self, nodes, num_sample=10):
        to_neighs = [self.adj_lists[int(node)] for node in nodes]
        if num_sample is not None:
            samp_neighs = [set(random.sample(sorted(to_neigh), num_sample))
                           if len(to_neigh) >= num_sample else to_neigh
                           for to_neigh in to_neighs]
        else:
            samp_neighs = to_neighs
        samp_neighs = [samp_neigh | {nodes[i]}
                       for i, samp_neigh in enumerate(samp_neighs)]
        _unique_nodes_list = list(set.union(*samp_neighs))
        unique_nodes = {n: i for i, n in enumerate(_unique_nodes_list)}
        return samp_neighs, unique_nodes, _unique_nodes_list

    def _nodes_map(self, nodes, hidden_embs, neighs):
        layer_nodes, samp_neighs, layer_nodes_dict = neighs
        assert len(samp_neighs) == len(nodes)
        return [layer_nodes_dict[x] for x in nodes]

    # -- host-side prep for one layer's aggregation ---------------------------
    def _prepare_aggregate(self, nodes, hidden_pad, valid_cols, pre_neighs,
                           b_pad):
        """Set logic + dense padded bf16 mask + padded embedding gather +
        host-computed neighbor counts."""
        unique_nodes_list, samp_neighs, unique_nodes = pre_neighs
        assert len(nodes) == len(samp_neighs)
        assert all(nodes[i] in samp_neighs[i] for i in range(len(samp_neighs)))
        if not self.gcn:
            samp_neighs = [samp_neighs[i] - {nodes[i]}
                           for i in range(len(samp_neighs))]
        B = len(samp_neighs)
        U = len(unique_nodes)
        u_pad, tu = _u_tiling(U)

        # Gather the embedding rows feeding the aggregation.  Padded index
        # slots point at row 0; their contribution is killed by the zero mask
        # columns, so no explicit zero-fill of pad rows is needed.
        uidx = np.zeros((u_pad,), np.int32)
        if hidden_pad.shape[0] == U:
            uidx[:U] = np.arange(U, dtype=np.int32)
        else:
            uidx[:U] = np.asarray(unique_nodes_list, dtype=np.int32)
        embed_pad = hidden_pad[jnp.asarray(uidx)]          # [U_pad, D_pad] f32

        # Dense binary mask; shipped to device in bf16 (half the H2D bytes).
        # TODO(synk): at production fan-out replace this dense [B, U] mask +
        # matmul with scalar-prefetched neighbor indices (PrefetchScalarGridSpec)
        # driving an in-kernel gather/segment-sum — the dominant cost at scale.
        mask_f32 = np.zeros((b_pad, u_pad), dtype=np.float32)
        col = [unique_nodes[n] for sn in samp_neighs for n in sn]
        row = [i for i in range(B) for _ in range(len(samp_neighs[i]))]
        mask_f32[row, col] = 1.0
        mask_un = mask_f32[:B, :U].copy()
        mask_bf = mask_f32.astype(jnp.bfloat16)

        # Neighbor counts are known on the host — no in-kernel XLU reduction.
        num_neigh = np.zeros((b_pad, 1), np.float32)
        num_neigh[:B, 0] = [len(sn) for sn in samp_neighs]

        pre_feature = embed_pad[:U, :valid_cols]           # == ref embed_matrix
        return (mask_bf, embed_pad, num_neigh, tu, samp_neighs, mask_un,
                pre_feature)

    def forward(self, nodes_batch):
        lower_layer_nodes = list(nodes_batch)
        nodes_batch_layers = [(lower_layer_nodes,)]
        for _ in range(self.num_layers):
            samp, ndict, lower_layer_nodes = \
                self._get_unique_neighs_list(lower_layer_nodes)
            nodes_batch_layers.insert(0, (lower_layer_nodes, samp, ndict))
        assert len(nodes_batch_layers) == self.num_layers + 1

        # Hidden embeddings stay lane-padded ([*, D_pad], padded cols == 0)
        # between layers so the next layer's gathers stay lane-dense.
        hidden_pad = self._raw_padded
        valid_cols = self.input_size
        sage_pre_feature = []
        pre_feature = samp_neighs = mask_un = None

        for index in range(1, self.num_layers + 1):
            nb = nodes_batch_layers[index][0]
            pre_neighs = nodes_batch_layers[index - 1]
            B = len(nb)
            b_pad, tb = _batch_tiling(B)

            (mask_bf, embed_pad, num_neigh, tu, samp_neighs, mask_un,
             pre_feature) = self._prepare_aggregate(nb, hidden_pad, valid_cols,
                                                    pre_neighs, b_pad)
            # TODO(synk): the reference also calls aggregate() a second time on
            # raw_features (only used when need_previous=True); skipped here.

            if index > 1:
                nb_rows = self._nodes_map(nb, hidden_pad, pre_neighs)
            else:
                nb_rows = nb
            sidx = np.zeros((b_pad,), np.int32)
            sidx[:B] = np.asarray(nb_rows, dtype=np.int32)
            self_pad = hidden_pad[jnp.asarray(sidx)]        # [b_pad, D_pad] f32

            out_pad = fused_sage_layer(
                jnp.asarray(mask_bf),
                embed_pad.astype(jnp.bfloat16),
                self_pad.astype(jnp.bfloat16),
                jnp.asarray(num_neigh),
                self._w_self[index], self._w_agg[index],
                tb, tu)

            sage_pre_feature.append(self_pad[:B, :valid_cols])
            hidden_pad = out_pad[:B]     # padded cols >= out_size are exactly 0
            valid_cols = self.out_size

        embs = hidden_pad[:, :self.out_size]
        return embs, pre_feature, samp_neighs, mask_un, sage_pre_feature


# ----------------------------------------------------------------------------
if __name__ == "__main__":
    random.seed(0)

    num_nodes = 24
    input_size = 32
    out_size = 32
    num_layers = 2

    # Deterministic small ring graph: each node connected to +/-1,2,3 mod N.
    adj_lists = {
        i: {(i + k) % num_nodes for k in (-3, -2, -1, 1, 2, 3)}
        for i in range(num_nodes)
    }

    raw_features = jax.random.normal(
        jax.random.PRNGKey(0), (num_nodes, input_size), dtype=jnp.float32)

    model = GraphSage(num_layers, input_size, out_size,
                      raw_features, adj_lists, gcn=False, agg_func='MEAN')

    nodes_batch = [0, 3, 7, 11, 15, 19]
    embs, pre_feature, samp_neighs, mask, sage_pre_feature = \
        model.forward(nodes_batch)

    jax.block_until_ready(embs)
    assert embs.shape == (len(nodes_batch), out_size)
    assert bool(jnp.all(jnp.isfinite(embs)))
    assert bool(jnp.all(embs >= 0.0)) and bool(jnp.all(embs <= 6.0))  # relu6
    print("KERNEL_OK")
</pallas_src>

<mosaic_0001>
module attributes {stable_mosaic.version = 11 : i64} {
  func.func @_fused_sage_kernel(%arg0: i32, %arg1: i32, %arg2: memref<8x128xbf16, #tpu.memory_space<vmem>>, %arg3: memref<128x128xbf16, #tpu.memory_space<vmem>>, %arg4: memref<8x128xbf16, #tpu.memory_space<vmem>>, %arg5: memref<8x1xf32, #tpu.memory_space<vmem>>, %arg6: memref<128x128xbf16, #tpu.memory_space<vmem>>, %arg7: memref<128x128xbf16, #tpu.memory_space<vmem>>, %arg8: memref<8x128xf32, #tpu.memory_space<vmem>>, %arg9: memref<8x128xf32, #tpu.memory_space<vmem>>) attributes {dimension_semantics = [#tpu.dimension_semantics<parallel>, #tpu.dimension_semantics<arbitrary>], iteration_bounds = array<i64: 4, 1>, scalar_prefetch = 0 : i64, scratch_operands = 1 : i64, tpu.core_type = #tpu.core_type<tc>, window_params = [{transform_indices = @transform_0, window_bounds = array<i64: 8, 128>}, {transform_indices = @transform_1, window_bounds = array<i64: 128, 128>}, {transform_indices = @transform_2, window_bounds = array<i64: 8, 128>}, {transform_indices = @transform_3, window_bounds = array<i64: 8, 1>}, {pipeline_mode = #tpu.pipeline_mode<synchronous>, transform_indices = @transform_4, window_bounds = array<i64: 128, 128>}, {pipeline_mode = #tpu.pipeline_mode<synchronous>, transform_indices = @transform_5, window_bounds = array<i64: 128, 128>}, {transform_indices = @transform_6, window_bounds = array<i64: 8, 128>}]} {
    %c0_i32 = arith.constant 0 : i32
    %0 = arith.cmpi eq, %arg1, %c0_i32 : i32
    %1 = arith.extui %0 : i1 to i32
    %c0_i32_0 = arith.constant 0 : i32
    %2 = arith.cmpi ne, %1, %c0_i32_0 : i32
    scf.if %2 {
      %cst_10 = arith.constant 0.000000e+00 : f32
      %12 = vector.broadcast %cst_10 : f32 to vector<8x128xf32>
      %c0_11 = arith.constant 0 : index
      %c0_12 = arith.constant 0 : index
      %13 = vector.load %arg9[%c0_11, %c0_12] : memref<8x128xf32, #tpu.memory_space<vmem>>, vector<8x128xf32>
      tpu.vector_store %arg9[%c0_11, %c0_12], %12 {strides = array<i32>} : memref<8x128xf32, #tpu.memory_space<vmem>>, vector<8x128xf32>,
    } else {
    }
    %c0 = arith.constant 0 : index
    %c0_1 = arith.constant 0 : index
    %3 = vector.load %arg9[%c0, %c0_1] : memref<8x128xf32, #tpu.memory_space<vmem>>, vector<8x128xf32>
    %c0_2 = arith.constant 0 : index
    %c0_3 = arith.constant 0 : index
    %4 = vector.load %arg2[%c0_2, %c0_3] : memref<8x128xbf16, #tpu.memory_space<vmem>>, vector<8x128xbf16>
    %c0_4 = arith.constant 0 : index
    %c0_5 = arith.constant 0 : index
    %5 = vector.load %arg3[%c0_4, %c0_5] : memref<128x128xbf16, #tpu.memory_space<vmem>>, vector<128x128xbf16>
    %cst = arith.constant dense<0.000000e+00> : vector<8x128xf32>
    %6 = tpu.matmul %4, %5, %cst {dimension_numbers = #tpu.dot_dimension_numbers<[1], [0], [0], [1], [0, 0, 1, 1], [], []>} : vector<8x128xbf16>, vector<128x128xbf16>, vector<8x128xf32> -> vector<8x128xf32>
    %7 = arith.addf %3, %6 : vector<8x128xf32>
    %c0_6 = arith.constant 0 : index
    %c0_7 = arith.constant 0 : index
    %8 = vector.load %arg9[%c0_6, %c0_7] : memref<8x128xf32, #tpu.memory_space<vmem>>, vector<8x128xf32>
    tpu.vector_store %arg9[%c0_6, %c0_7], %7 {strides = array<i32>} : memref<8x128xf32, #tpu.memory_space<vmem>>, vector<8x128xf32>,
    %c0_i32_8 = arith.constant 0 : i32
    %9 = arith.cmpi eq, %arg1, %c0_i32_8 : i32
    %10 = arith.extui %9 : i1 to i32
    %c0_i32_9 = arith.constant 0 : i32
    %11 = arith.cmpi ne, %10, %c0_i32_9 : i32
    scf.if %11 {
      %c0_10 = arith.constant 0 : index
      %c0_11 = arith.constant 0 : index
      %12 = vector.load %arg5[%c0_10, %c0_11] : memref<8x1xf32, #tpu.memory_space<vmem>>, vector<8x1xf32>
      %cst_12 = arith.constant 1.000000e+00 : f32
      %13 = vector.broadcast %cst_12 : f32 to vector<8x1xf32>
      %14 = arith.maximumf %12, %13 : vector<8x1xf32>
      %15 = tpu.reciprocal %14 {approx = true} : vector<8x1xf32> -> vector<8x1xf32>
      %cst_13 = arith.constant 0.000000e+00 : f32
      %16 = vector.broadcast %cst_13 : f32 to vector<8x1xf32>
      %17 = arith.cmpf ogt, %12, %16 : vector<8x1xf32>
      %c0_14 = arith.constant 0 : index
      %c0_15 = arith.constant 0 : index
      %18 = vector.load %arg9[%c0_14, %c0_15] : memref<8x128xf32, #tpu.memory_space<vmem>>, vector<8x128xf32>
      %19 = vector.broadcast %15 : vector<8x1xf32> to vector<8x128xf32>
      %20 = arith.mulf %18, %19 : vector<8x128xf32>
      %cst_16 = arith.constant 5.000000e-01 : f32
      %21 = vector.shape_cast %17 : vector<8x1xi1> to vector<8x1xi1>
      %22 = vector.broadcast %21 : vector<8x1xi1> to vector<8x128xi1>
      %23 = vector.broadcast %cst_16 : f32 to vector<8x128xf32>
      %24 = arith.select %22, %20, %23 : vector<8x128xi1>, vector<8x128xf32>
      %c0_17 = arith.constant 0 : index
      %c0_18 = arith.constant 0 : index
      %25 = vector.load %arg4[%c0_17, %c0_18] : memref<8x128xbf16, #tpu.memory_space<vmem>>, vector<8x128xbf16>
      %c0_19 = arith.constant 0 : index
      %c0_20 = arith.constant 0 : index
      %26 = vector.load %arg6[%c0_19, %c0_20] : memref<128x128xbf16, #tpu.memory_space<vmem>>, vector<128x128xbf16>
      %cst_21 = arith.constant dense<0.000000e+00> : vector<8x128xf32>
      %27 = tpu.matmul %25, %26, %cst_21 {dimension_numbers = #tpu.dot_dimension_numbers<[1], [0], [0], [1], [0, 0, 1, 1], [], []>} : vector<8x128xbf16>, vector<128x128xbf16>, vector<8x128xf32> -> vector<8x128xf32>
      %28 = arith.truncf %24 : vector<8x128xf32> to vector<8x128xbf16>
      %c0_22 = arith.constant 0 : index
      %c0_23 = arith.constant 0 : index
      %29 = vector.load %arg7[%c0_22, %c0_23] : memref<128x128xbf16, #tpu.memory_space<vmem>>, vector<128x128xbf16>
      %cst_24 = arith.constant dense<0.000000e+00> : vector<8x128xf32>
      %30 = tpu.matmul %28, %29, %cst_24 {dimension_numbers = #tpu.dot_dimension_numbers<[1], [0], [0], [1], [0, 0, 1, 1], [], []>} : vector<8x128xbf16>, vector<128x128xbf16>, vector<8x128xf32> -> vector<8x128xf32>
      %31 = arith.addf %27, %30 : vector<8x128xf32>
      %cst_25 = arith.constant 0.000000e+00 : f32
      %32 = vector.broadcast %cst_25 : f32 to vector<8x128xf32>
      %33 = arith.maximumf %31, %32 : vector<8x128xf32>
      %cst_26 = arith.constant 6.000000e+00 : f32
      %34 = vector.broadcast %cst_26 : f32 to vector<8x128xf32>
      %35 = arith.minimumf %33, %34 : vector<8x128xf32>
      %c0_27 = arith.constant 0 : index
      %c0_28 = arith.constant 0 : index
      %36 = vector.load %arg8[%c0_27, %c0_28] : memref<8x128xf32, #tpu.memory_space<vmem>>, vector<8x128xf32>
      tpu.vector_store %arg8[%c0_27, %c0_28], %35 {strides = array<i32>} : memref<8x128xf32, #tpu.memory_space<vmem>>, vector<8x128xf32>,
    } else {
    }
    return
  }
  func.func @transform_0(%arg0: i32, %arg1: i32) -> (i32, i32) {
    %c0_i32 = arith.constant 0 : i32
    return %arg0, %arg1 : i32, i32
  }
  func.func @transform_1(%arg0: i32, %arg1: i32) -> (i32, i32) {
    %c0_i32 = arith.constant 0 : i32
    %c0_i32_0 = arith.constant 0 : i32
    return %arg1, %c0_i32 : i32, i32
  }
  func.func @transform_2(%arg0: i32, %arg1: i32) -> (i32, i32) {
    %c0_i32 = arith.constant 0 : i32
    %c0_i32_0 = arith.constant 0 : i32
    return %arg0, %c0_i32 : i32, i32
  }
  func.func @transform_3(%arg0: i32, %arg1: i32) -> (i32, i32) {
    %c0_i32 = arith.constant 0 : i32
    %c0_i32_0 = arith.constant 0 : i32
    return %arg0, %c0_i32 : i32, i32
  }
  func.func @transform_4(%arg0: i32, %arg1: i32) -> (i32, i32) {
    %c0_i32 = arith.constant 0 : i32
    %c0_i32_0 = arith.constant 0 : i32
    %c0_i32_1 = arith.constant 0 : i32
    return %c0_i32, %c0_i32_0 : i32, i32
  }
  func.func @transform_5(%arg0: i32, %arg1: i32) -> (i32, i32) {
    %c0_i32 = arith.constant 0 : i32
    %c0_i32_0 = arith.constant 0 : i32
    %c0_i32_1 = arith.constant 0 : i32
    return %c0_i32, %c0_i32_0 : i32, i32
  }
  func.func @transform_6(%arg0: i32, %arg1: i32) -> (i32, i32) {
    %c0_i32 = arith.constant 0 : i32
    %c0_i32_0 = arith.constant 0 : i32
    return %arg0, %c0_i32 : i32, i32
  }
}

</mosaic_0001>

<llo_original>
// kernel: tpu_custom_call.1
$region0: #{tpu_custom_call.1}
  #allocation0 [shape = 'u32[]', space=smem, size = 0x4, offset = 0x4, fixed_abs, tag = 'smem constant byte address 0x4 - core index']
  #allocation1 [shape = 'u32[72,128]{1,0:T(1,128)}', space=vmem, size = 0x9000, scoped, tag = 'internal scratch']
  #allocation2 [shape = 'f32[8,128]{1,0:T(8,128)}', space=vmem, size = 0x1000, scoped, tag = 'scratch operand']
  %s0 = inlined_call_operand.vmem [shape: bf16[32,128], index: 0, kind: input, shape index: {}]
  %s1 = inlined_call_operand.hbm [shape: bf16[128,128], index: 1, kind: input, shape index: {}]
  %s2 = inlined_call_operand.vmem [shape: bf16[32,128], index: 2, kind: input, shape index: {}]
  %s3 = inlined_call_operand.vmem [shape: f32[32,1], index: 3, kind: input, shape index: {}]
  %s4 = inlined_call_operand.hbm [shape: bf16[128,128], index: 4, kind: input, shape index: {}]
  %s5 = inlined_call_operand.hbm [shape: bf16[128,128], index: 5, kind: input, shape index: {}]
  %s6 = inlined_call_operand.hbm [shape: f32[32,128], index: 6, kind: output, shape index: {}]
  %s7 = sld [smem:[#allocation0]]
  $region77: #{tpu_custom_call.1} parent=0
    _
  %s9 = ssub.s32 1, %s7
  %s10 = scalar_select 0, %s9, %s7
  $region1: #{tpu_custom_call.1} parent=0
    #allocation3 [shape = 'u8[32768]{0}', space=vmem, size = 0x8000, scoped, tag = 'input window, operand 1, single buffered']
    #allocation4 [shape = 's32[2]{0}', space=sflag, size = 0x8, scoped, tag = 'scoped memory for tpu_custom_call.1']
    #allocation5 [shape = 's32[2]{0}', space=sflag, size = 0x8, scoped, tag = 'scoped memory for tpu_custom_call.1']
    #allocation6 [shape = 'u8[32768]{0}', space=vmem, size = 0x8000, scoped, tag = 'input window, operand 4, single buffered']
    #allocation7 [shape = 's32[1]{0}', space=sflag, size = 0x4, scoped, tag = 'scoped memory for tpu_custom_call.1']
    #allocation8 [shape = 'u8[32768]{0}', space=vmem, size = 0x8000, scoped, tag = 'input window, operand 5, single buffered']
    #allocation9 [shape = 'u8[8192]{0}', space=vmem, size = 0x2000, scoped, tag = 'output window, operand 0']
    %11 = vsyncpa [#allocation4], 0
    %12 = vsyncpa [#allocation7], 0
    %13 = vsyncpa [#allocation5], 0
    %s14 = scalar_lea.sflag [#allocation5], 1
    %15 = vsyncpa %s14, 0
    loop: start=0, step=1, limit=6
    $region2: #{tpu_custom_call.1} parent=1 // loop_pre_header
      _
    $region3: #{tpu_custom_call.1} parent=1 // loop_header
      %s17 = sphi 0, %s21
      %p18 = scmp.ge.s32.totalorder %s17, 6
      %s24 = sphi 0, %s36
      %s25 = sphi 0, %s32
      %s26 = sphi 0, %s24
      %s27 = sphi 0, %s25
      %s28 = sphi 0, %s26
      %s29 = sphi 0, %s27
      %s41 = sphi 0, %s43
      %s44 = sphi 0, %s41
      %s45 = sphi 0, %s44
      %s61 = sphi 0, %s45
      %s67 = sphi 0, %s69
      %s70 = sphi 0, %s67
      %s71 = sphi 0, %s70
      %s87 = sphi 0, %s71
      %s93 = sphi 0, %s95
      %s96 = sphi 0, %s93
      %s97 = sphi 0, %s96
      %s113 = sphi 0, %s97
      %s119 = sphi 0, %s121
      %s122 = sphi 0, %s119
      %s123 = sphi 0, %s122
      %s139 = sphi 0, %s123
      %s143 = sphi 0, %s143
      %s145 = sphi 0, %s143
      %s146 = sphi 0, %s145
      %s160 = sphi 0, %s146
      %s164 = sphi 0, %s164
      %s166 = sphi 0, %s164
      %s167 = sphi 0, %s166
      %s181 = sphi 0, %s167
      %s187 = sphi 0, %s189
      %s190 = sphi 0, %s187
      %s191 = sphi 0, %s190
      %s207 = sphi 0, %s191
    $region4: #{tpu_custom_call.1} parent=1 // loop_header_branch
      %20 = sbr.rel (%p18) target = $region8
    $region5: #{tpu_custom_call.1} parent=1 // loop_body
      %s22 = ssub.s32 %s17, 1
      %s23 = ssub.s32 %s17, 2
      %s30 = sadd.s32 1, %s25
      %p31 = scmp.ge.s32.totalorder %s30, 1
      %s32 = scalar_select %p31, 0, %s30
      %s33 = sadd.s32 1, %s24
      %s34 = scalar_select %p31, %s33, %s24
      %p35 = scmp.ge.s32.totalorder %s34, 4
      %s36 = scalar_select %p35, 0, %s34
      %s37 = ssub.s32 %s24, %s36
      %s38 = ssub.s32 %s25, %s32
      %s39 = sor.u32 %s37, %s38
      %p40 = scmp.eq.s32.totalorder %s39, 0
      %s42 = sadd.s32 %s41, 1
      %s43 = scalar_select %p40, %s41, %s42
      %p46 = pneg %p40
      %p47 = scmp.eq.s32.totalorder %s17, 3
      %p48 = por %p46, %p47
      %p49 = scmp.ne.s32.totalorder %s41, %s44
      %p50 = scmp.eq.s32.totalorder %s17, 0
      %p51 = por %p49, %p50
      %p52 = scmp.ne.s32.totalorder %s41, %s44
      %p53 = scmp.eq.s32.totalorder %s22, 3
      %p54 = por %p52, %p53
      %p55 = scmp.ne.s32.totalorder %s44, %s45
      %p56 = scmp.eq.s32.totalorder %s22, 0
      %p57 = por %p55, %p56
      %p58 = scmp.ne.s32.totalorder %s44, %s45
      %p59 = scmp.eq.s32.totalorder %s23, 3
      %p60 = por %p58, %p59
      %p62 = scmp.ne.s32.totalorder %s45, %s61
      %p63 = scmp.eq.s32.totalorder %s23, 0
      %p64 = por %p62, %p63
      %s65 = ssub.s32 %s25, %s32
      %p66 = scmp.eq.s32.totalorder %s65, 0
      %s68 = sadd.s32 %s67, 1
      %s69 = scalar_select %p66, %s67, %s68
      %p72 = pneg %p66
      %p73 = scmp.eq.s32.totalorder %s17, 3
      %p74 = por %p72, %p73
      %p75 = scmp.ne.s32.totalorder %s67, %s70
      %p76 = scmp.eq.s32.totalorder %s17, 0
      %p77 = por %p75, %p76
      %p78 = scmp.ne.s32.totalorder %s67, %s70
      %p79 = scmp.eq.s32.totalorder %s22, 3
      %p80 = por %p78, %p79
      %p81 = scmp.ne.s32.totalorder %s70, %s71
      %p82 = scmp.eq.s32.totalorder %s22, 0
      %p83 = por %p81, %p82
      %p84 = scmp.ne.s32.totalorder %s70, %s71
      %p85 = scmp.eq.s32.totalorder %s23, 3
      %p86 = por %p84, %p85
      %p88 = scmp.ne.s32.totalorder %s71, %s87
      %p89 = scmp.eq.s32.totalorder %s23, 0
      %p90 = por %p88, %p89
      %s91 = ssub.s32 %s24, %s36
      %p92 = scmp.eq.s32.totalorder %s91, 0
      %s94 = sadd.s32 %s93, 1
      %s95 = scalar_select %p92, %s93, %s94
      %p98 = pneg %p92
      %p99 = scmp.eq.s32.totalorder %s17, 3
      %p100 = por %p98, %p99
      %p101 = scmp.ne.s32.totalorder %s93, %s96
      %p102 = scmp.eq.s32.totalorder %s17, 0
      %p103 = por %p101, %p102
      %p104 = scmp.ne.s32.totalorder %s93, %s96
      %p105 = scmp.eq.s32.totalorder %s22, 3
      %p106 = por %p104, %p105
      %p107 = scmp.ne.s32.totalorder %s96, %s97
      %p108 = scmp.eq.s32.totalorder %s22, 0
      %p109 = por %p107, %p108
      %p110 = scmp.ne.s32.totalorder %s96, %s97
      %p111 = scmp.eq.s32.totalorder %s23, 3
      %p112 = por %p110, %p111
      %p114 = scmp.ne.s32.totalorder %s97, %s113
      %p115 = scmp.eq.s32.totalorder %s23, 0
      %p116 = por %p114, %p115
      %s117 = ssub.s32 %s24, %s36
      %p118 = scmp.eq.s32.totalorder %s117, 0
      %s120 = sadd.s32 %s119, 1
      %s121 = scalar_select %p118, %s119, %s120
      %p124 = pneg %p118
      %p125 = scmp.eq.s32.totalorder %s17, 3
      %p126 = por %p124, %p125
      %p127 = scmp.ne.s32.totalorder %s119, %s122
      %p128 = scmp.eq.s32.totalorder %s17, 0
      %p129 = por %p127, %p128
      %p130 = scmp.ne.s32.totalorder %s119, %s122
      %p131 = scmp.eq.s32.totalorder %s22, 3
      %p132 = por %p130, %p131
      %p133 = scmp.ne.s32.totalorder %s122, %s123
      %p134 = scmp.eq.s32.totalorder %s22, 0
      %p135 = por %p133, %p134
      %p136 = scmp.ne.s32.totalorder %s122, %s123
      %p137 = scmp.eq.s32.totalorder %s23, 3
      %p138 = por %p136, %p137
      %p140 = scmp.ne.s32.totalorder %s123, %s139
      %p141 = scmp.eq.s32.totalorder %s23, 0
      %p142 = por %p140, %p141
      %s144 = sadd.s32 %s143, 1
      %p147 = scmp.eq.s32.totalorder %s17, 3
      %p148 = scmp.ne.s32.totalorder %s143, %s145
      %p149 = scmp.eq.s32.totalorder %s17, 0
      %p150 = por %p148, %p149
      %p151 = scmp.ne.s32.totalorder %s143, %s145
      %p152 = scmp.eq.s32.totalorder %s22, 3
      %p153 = por %p151, %p152
      %p154 = scmp.ne.s32.totalorder %s145, %s146
      %p155 = scmp.eq.s32.totalorder %s22, 0
      %p156 = por %p154, %p155
      %p157 = scmp.ne.s32.totalorder %s145, %s146
      %p158 = scmp.eq.s32.totalorder %s23, 3
      %p159 = por %p157, %p158
      %p161 = scmp.ne.s32.totalorder %s146, %s160
      %p162 = scmp.eq.s32.totalorder %s23, 0
      %p163 = por %p161, %p162
      %s165 = sadd.s32 %s164, 1
      %p168 = scmp.eq.s32.totalorder %s17, 3
      %p169 = scmp.ne.s32.totalorder %s164, %s166
      %p170 = scmp.eq.s32.totalorder %s17, 0
      %p171 = por %p169, %p170
      %p172 = scmp.ne.s32.totalorder %s164, %s166
      %p173 = scmp.eq.s32.totalorder %s22, 3
      %p174 = por %p172, %p173
      %p175 = scmp.ne.s32.totalorder %s166, %s167
      %p176 = scmp.eq.s32.totalorder %s22, 0
      %p177 = por %p175, %p176
      %p178 = scmp.ne.s32.totalorder %s166, %s167
      %p179 = scmp.eq.s32.totalorder %s23, 3
      %p180 = por %p178, %p179
      %p182 = scmp.ne.s32.totalorder %s167, %s181
      %p183 = scmp.eq.s32.totalorder %s23, 0
      %p184 = por %p182, %p183
      %s185 = ssub.s32 %s24, %s36
      %p186 = scmp.eq.s32.totalorder %s185, 0
      %s188 = sadd.s32 %s187, 1
      %s189 = scalar_select %p186, %s187, %s188
      %p192 = pneg %p186
      %p193 = scmp.eq.s32.totalorder %s17, 3
      %p194 = por %p192, %p193
      %p195 = scmp.ne.s32.totalorder %s187, %s190
      %p196 = scmp.eq.s32.totalorder %s17, 0
      %p197 = por %p195, %p196
      %p198 = scmp.ne.s32.totalorder %s187, %s190
      %p199 = scmp.eq.s32.totalorder %s22, 3
      %p200 = por %p198, %p199
      %p201 = scmp.ne.s32.totalorder %s190, %s191
      %p202 = scmp.eq.s32.totalorder %s22, 0
      %p203 = por %p201, %p202
      %p204 = scmp.ne.s32.totalorder %s190, %s191
      %p205 = scmp.eq.s32.totalorder %s23, 3
      %p206 = por %p204, %p205
      %p208 = scmp.ne.s32.totalorder %s191, %s207
      %p209 = scmp.eq.s32.totalorder %s23, 0
      %p210 = por %p208, %p209
      %p211 = scmp.le.s32.totalorder 1, %s17
      %p212 = scmp.lt.s32.totalorder %s17, 5
      %p213 = pnand %p211, %p212
      %p214 = pneg %p213
      // Predicated region
      $region9: #{tpu_custom_call.1} parent=5 // pred_check
        _
      $region10: #{tpu_custom_call.1} parent=5 // pred_check_branch
        %216 = sbr.rel (%p213) target = $region12
      $region11: #{tpu_custom_call.1} parent=5 // pred_region
        %s217 = ssub.s32 %s17, 1
        // Predicated region
        $region13: #{tpu_custom_call.1} parent=11 // pred_check
          %p218 = pneg %p83
        $region14: #{tpu_custom_call.1} parent=11 // pred_check_branch
          %220 = sbr.rel (%p218) target = $region16
        $region15: #{tpu_custom_call.1} parent=11 // pred_region
          %s221 = smul.u32 16, %s27
          %223 = vsyncadd [#allocation4], 0
          %s224 = smul.addr %s221, 4
          %s225 = scalar_lea.hbm %s1, %s224
          %s226 = sshll.u32 %s225, 4
          %s227 = int_to_ptr.hbm [resolvable:$true] %s226
          %s228 = sshll.u32 [#allocation3], 4
          %s229 = int_to_ptr.vmem [resolvable:$true] %s228
          %234 = dma.hbm_to_vmem [thread:$0]  %s227, 1024, %s229, [#allocation4], 64, 64, 4
        $region16: #{tpu_custom_call.1} parent=11 // pred_fallthru
          _
        // Predicated region
        $region17: #{tpu_custom_call.1} parent=11 // pred_check
          %p235 = pneg %p156
        $region18: #{tpu_custom_call.1} parent=11 // pred_check_branch
          %237 = sbr.rel (%p235) target = $region20
        $region19: #{tpu_custom_call.1} parent=11 // pred_region
          %239 = vsyncadd [#allocation7], 0
          %s240 = sshll.u32 %s4, 4
          %s241 = int_to_ptr.hbm [resolvable:$true] %s240
          %s242 = sshll.u32 [#allocation6], 4
          %s243 = int_to_ptr.vmem [resolvable:$true] %s242
          %248 = dma.hbm_to_vmem [thread:$0]  %s241, 1024, %s243, [#allocation7], 64, 64, 4
        $region20: #{tpu_custom_call.1} parent=11 // pred_fallthru
          _
        // Predicated region
        $region21: #{tpu_custom_call.1} parent=11 // pred_check
          %p249 = pneg %p177
        $region22: #{tpu_custom_call.1} parent=11 // pred_check_branch
          %251 = sbr.rel (%p249) target = $region24
        $region23: #{tpu_custom_call.1} parent=11 // pred_region
          %253 = vsyncadd [#allocation7], 0
          %s254 = sshll.u32 %s5, 4
          %s255 = int_to_ptr.hbm [resolvable:$true] %s254
          %s256 = sshll.u32 [#allocation8], 4
          %s257 = int_to_ptr.vmem [resolvable:$true] %s256
          %262 = dma.hbm_to_vmem [thread:$0]  %s255, 1024, %s257, [#allocation7], 64, 64, 4
        $region24: #{tpu_custom_call.1} parent=11 // pred_fallthru
          _
      $region12: #{tpu_custom_call.1} parent=5 // pred_fallthru
        _
      %p263 = scmp.lt.s32.totalorder %s17, 4
      // Predicated region
      $region25: #{tpu_custom_call.1} parent=5 // pred_check
        %p264 = pneg %p263
      $region26: #{tpu_custom_call.1} parent=5 // pred_check_branch
        %266 = sbr.rel (%p264) target = $region28
      $region27: #{tpu_custom_call.1} parent=5 // pred_region
        // Predicated region
        $region29: #{tpu_custom_call.1} parent=27 // pred_check
          %p267 = pneg %p51
        $region30: #{tpu_custom_call.1} parent=27 // pred_check_branch
          %269 = sbr.rel (%p267) target = $region32
        $region31: #{tpu_custom_call.1} parent=27 // pred_region
          %p270 = scmp.lt.s32.totalorder %s24, 3
          %s271 = scalar_select %p270, %s24, 3
          %p272 = scmp.lt.s32.totalorder %s25, 0
          %s273 = scalar_select %p272, %s25, 0
          %s274 = sadd.s32 %s273, %s271
          %s275 = smul.addr %s274, 4
          %s276 = scalar_lea.vmem %s0, %s275
        $region32: #{tpu_custom_call.1} parent=27 // pred_fallthru
          _
        // Predicated region
        $region33: #{tpu_custom_call.1} parent=27 // pred_check
          %p277 = pneg %p103
        $region34: #{tpu_custom_call.1} parent=27 // pred_check_branch
          %279 = sbr.rel (%p277) target = $region36
        $region35: #{tpu_custom_call.1} parent=27 // pred_region
          %p280 = scmp.lt.s32.totalorder %s24, 3
          %s281 = scalar_select %p280, %s24, 3
          %s282 = smul.addr %s281, 4
          %s283 = scalar_lea.vmem %s2, %s282
        $region36: #{tpu_custom_call.1} parent=27 // pred_fallthru
          _
        // Predicated region
        $region37: #{tpu_custom_call.1} parent=27 // pred_check
          %p284 = pneg %p129
        $region38: #{tpu_custom_call.1} parent=27 // pred_check_branch
          %286 = sbr.rel (%p284) target = $region40
        $region39: #{tpu_custom_call.1} parent=27 // pred_region
          %p287 = scmp.lt.s32.totalorder %s24, 3
          %s288 = scalar_select %p287, %s24, 3
          %s289 = smul.addr %s288, 8
          %s290 = scalar_lea.vmem %s3, %s289
        $region40: #{tpu_custom_call.1} parent=27 // pred_fallthru
          _
      $region28: #{tpu_custom_call.1} parent=5 // pred_fallthru
        _
      %p291 = scmp.le.s32.totalorder 1, %s17
      %p292 = scmp.lt.s32.totalorder %s17, 5
      %p293 = pnand %p291, %p292
      %p294 = pneg %p293
      // Predicated region
      $region41: #{tpu_custom_call.1} parent=5 // pred_check
        _
      $region42: #{tpu_custom_call.1} parent=5 // pred_check_branch
        %296 = sbr.rel (%p293) target = $region44
      $region43: #{tpu_custom_call.1} parent=5 // pred_region
        %s297 = ssub.s32 %s17, 1
        // Predicated region
        $region45: #{tpu_custom_call.1} parent=43 // pred_check
          %p298 = pneg %p83
        $region46: #{tpu_custom_call.1} parent=43 // pred_check_branch
          %300 = sbr.rel (%p298) target = $region48
        $region47: #{tpu_custom_call.1} parent=43 // pred_region
          %302 = dma.done [#allocation4], 1024
        $region48: #{tpu_custom_call.1} parent=43 // pred_fallthru
          _
        // Predicated region
        $region49: #{tpu_custom_call.1} parent=43 // pred_check
          %p303 = pneg %p156
        $region50: #{tpu_custom_call.1} parent=43 // pred_check_branch
          %305 = sbr.rel (%p303) target = $region52
        $region51: #{tpu_custom_call.1} parent=43 // pred_region
          %307 = dma.done [#allocation7], 1024
        $region52: #{tpu_custom_call.1} parent=43 // pred_fallthru
          _
        // Predicated region
        $region53: #{tpu_custom_call.1} parent=43 // pred_check
          %p308 = pneg %p177
        $region54: #{tpu_custom_call.1} parent=43 // pred_check_branch
          %310 = sbr.rel (%p308) target = $region56
        $region55: #{tpu_custom_call.1} parent=43 // pred_region
          %312 = dma.done [#allocation7], 1024
        $region56: #{tpu_custom_call.1} parent=43 // pred_fallthru
          _
        %p313 = scmp.lt.s32.totalorder %s26, 3
        %s314 = scalar_select %p313, %s26, 3
        %p315 = scmp.lt.s32.totalorder %s27, 0
        %s316 = scalar_select %p315, %s27, 0
        %s317 = sadd.s32 %s316, %s314
        %s318 = smul.addr %s317, 4
        %s319 = scalar_lea.vmem %s0, %s318
        %p320 = pneg %p57
        %p321 = pneg %p54
        %p322 = pneg %p83
        %p323 = pneg %p80
        %p324 = scmp.lt.s32.totalorder %s26, 3
        %s325 = scalar_select %p324, %s26, 3
        %s326 = smul.addr %s325, 4
        %s327 = scalar_lea.vmem %s2, %s326
        %p328 = pneg %p109
        %p329 = pneg %p106
        %p330 = scmp.lt.s32.totalorder %s26, 3
        %s331 = scalar_select %p330, %s26, 3
        %s332 = smul.addr %s331, 8
        %s333 = scalar_lea.vmem %s3, %s332
        %p334 = pneg %p135
        %p335 = pneg %p132
        %p336 = pneg %p156
        %p337 = pneg %p153
        %p338 = pneg %p177
        %p339 = pneg %p174
        %p340 = pneg %p203
        %p341 = pneg %p200
        %s342 = sand.u32 %s190, 1
        %s343 = scalar_lea.sflag [#allocation5], %s342
        %s344 = sand.u32 %s190, 1
        %s345 = smul.addr %s344, 8
        %s346 = scalar_lea.vmem [#allocation9], %s345
        %p347 = scmp.lt.s32.totalorder %s26, 3
        %s348 = scalar_select %p347, %s26, 3
        %p349 = scmp.lt.s32.totalorder %s27, 0
        %s350 = scalar_select %p349, %s27, 0
        %s351 = sadd.s32 %s350, %s348
        %s352 = smul.addr %s351, 4
        %s353 = scalar_lea.vmem %s0, %s352
        %s354 = smul.u32 16, %s27
        %p355 = scmp.lt.s32.totalorder %s26, 3
        %s356 = scalar_select %p355, %s26, 3
        %s357 = smul.addr %s356, 4
        %s358 = scalar_lea.vmem %s2, %s357
        %p359 = scmp.lt.s32.totalorder %s26, 3
        %s360 = scalar_select %p359, %s26, 3
        %s361 = smul.addr %s360, 8
        %s362 = scalar_lea.vmem %s3, %s361
        %p363 = scmp.eq.s32.totalorder %s27, 0
        // Predicated region
        $region57: #{tpu_custom_call.1} parent=43 // pred_check
          %p364 = pneg %p363
        $region58: #{tpu_custom_call.1} parent=43 // pred_check_branch
          %366 = sbr.rel (%p364) target = $region60
        $region59: #{tpu_custom_call.1} parent=43 // pred_region
          %367 = vst [vmem:[#allocation2] sm:$0xff] 0.0
        $region60: #{tpu_custom_call.1} parent=43 // pred_fallthru
          _
        %v368 = vld [vmem:[#allocation2] sm:$0xff]
        %v369 = vld [vmem:[%s353] sm:$0xf]
        %v370 = vld [vmem:[#allocation3] sm:$0xf]
        %v371 = vld [vmem:[#allocation3 + $0x4] sm:$0xf]
        %v372 = vld [vmem:[#allocation3 + $0x8] sm:$0xf]
        %v373 = vld [vmem:[#allocation3 + $0xc] sm:$0xf]
        %v374 = vld [vmem:[#allocation3 + $0x10] sm:$0xf]
        %v375 = vld [vmem:[#allocation3 + $0x14] sm:$0xf]
        %v376 = vld [vmem:[#allocation3 + $0x18] sm:$0xf]
        %v377 = vld [vmem:[#allocation3 + $0x1c] sm:$0xf]
        %v378 = vld [vmem:[#allocation3 + $0x20] sm:$0xf]
        %v379 = vld [vmem:[#allocation3 + $0x24] sm:$0xf]
        %v380 = vld [vmem:[#allocation3 + $0x28] sm:$0xf]
        %v381 = vld [vmem:[#allocation3 + $0x2c] sm:$0xf]
        %v382 = vld [vmem:[#allocation3 + $0x30] sm:$0xf]
        %v383 = vld [vmem:[#allocation3 + $0x34] sm:$0xf]
        %v384 = vld [vmem:[#allocation3 + $0x38] sm:$0xf]
        %v385 = vld [vmem:[#allocation3 + $0x3c] sm:$0xf]
        %v402 = vunpack.c.l.b16 %v370
        %v403 = vunpack.c.l.b16 %v371
        %v404 = vunpack.c.l.b16 %v372
        %v405 = vunpack.c.l.b16 %v373
        %v406 = vunpack.c.l.b16 %v374
        %v407 = vunpack.c.l.b16 %v375
        %v408 = vunpack.c.l.b16 %v376
        %v409 = vunpack.c.l.b16 %v377
        %v410 = vunpack.c.l.b16 %v378
        %v411 = vunpack.c.l.b16 %v379
        %v412 = vunpack.c.l.b16 %v380
        %v413 = vunpack.c.l.b16 %v381
        %v414 = vunpack.c.l.b16 %v382
        %v415 = vunpack.c.l.b16 %v383
        %v416 = vunpack.c.l.b16 %v384
        %v417 = vunpack.c.l.b16 %v385
        %v418 = vpack.c.b16 %v403, %v402
        %v419 = vpack.c.b16 %v405, %v404
        %v420 = vpack.c.b16 %v407, %v406
        %v421 = vpack.c.b16 %v409, %v408
        %v422 = vpack.c.b16 %v411, %v410
        %v423 = vpack.c.b16 %v413, %v412
        %v424 = vpack.c.b16 %v415, %v414
        %v425 = vpack.c.b16 %v417, %v416
        %434 = vmatpush.bf16.msra.mxu0 %v425
        %435 = vmatpush.bf16.msra.mxu0 %v424
        %436 = vmatpush.bf16.msra.mxu0 %v423
        %437 = vmatpush.bf16.msra.mxu0 %v422
        %438 = vmatpush.bf16.msra.mxu0 %v421
        %439 = vmatpush.bf16.msra.mxu0 %v420
        %440 = vmatpush.bf16.msra.mxu0 %v419
        %441 = vmatpush.bf16.msra.mxu0 %v418
        %442 = vmatmul.bf16.gmra.mxu0 %v369
        %v443 = vpop.f32.mrf.mxu0
        %v444 = vadd.f32 0.0, %v443
        %v445 = vpop.f32.mrf.mxu0
        %446 = vdwg.mxu0
        %v447 = vadd.f32 %v368, %v444
        %448 = vst [vmem:[#allocation2] sm:$0xff] %v447
        // Predicated region
        $region61: #{tpu_custom_call.1} parent=43 // pred_check
          %p449 = pneg %p363
        $region62: #{tpu_custom_call.1} parent=43 // pred_check_branch
          %451 = sbr.rel (%p449) target = $region64
        $region63: #{tpu_custom_call.1} parent=43 // pred_region
          %v452 = vld [vmem:[%s362] sm:$0xff]
          %v453 = vmax.f32 %v452, 1.0
          %v454 = vrcp.pop %v453
          %vm455 = vcmp.gt.f32.partialorder %v452, 0.0
          %v456 = vld [vmem:[#allocation2] sm:$0xff]
          %458 = vset.pattern.permute.xlu0 0
          %459 = vperm.xlu0 %458, %v454
          %v460 = vpop.permute.xlu0 %459
          %v462 = vmul.f32 %v456, %v460
          %v463 = vsel %vm455, 1, 0
          %464 = vset.pattern.permute.xlu0 0
          %465 = vperm.xlu0 %464, %v463
          %v466 = vpop.permute.xlu0 %465
          %vm467 = vcmp.eq.s32.totalorder %v466, 1
          %v468 = vsel %vm467, %v462, 0.5
          %v469 = vld [vmem:[%s358] sm:$0xf]
          %v470 = vld [vmem:[#allocation6] sm:$0xf]
          %v471 = vld [vmem:[#allocation6 + $0x4] sm:$0xf]
          %v472 = vld [vmem:[#allocation6 + $0x8] sm:$0xf]
          %v473 = vld [vmem:[#allocation6 + $0xc] sm:$0xf]
          %v474 = vld [vmem:[#allocation6 + $0x10] sm:$0xf]
          %v475 = vld [vmem:[#allocation6 + $0x14] sm:$0xf]
          %v476 = vld [vmem:[#allocation6 + $0x18] sm:$0xf]
          %v477 = vld [vmem:[#allocation6 + $0x1c] sm:$0xf]
          %v478 = vld [vmem:[#allocation6 + $0x20] sm:$0xf]
          %v479 = vld [vmem:[#allocation6 + $0x24] sm:$0xf]
          %v480 = vld [vmem:[#allocation6 + $0x28] sm:$0xf]
          %v481 = vld [vmem:[#allocation6 + $0x2c] sm:$0xf]
          %v482 = vld [vmem:[#allocation6 + $0x30] sm:$0xf]
          %v483 = vld [vmem:[#allocation6 + $0x34] sm:$0xf]
          %v484 = vld [vmem:[#allocation6 + $0x38] sm:$0xf]
          %v485 = vld [vmem:[#allocation6 + $0x3c] sm:$0xf]
          %v486 = vpack.c.bf16 %v468, %v468
          %v487 = vld [vmem:[#allocation8] sm:$0xf]
          %v488 = vld [vmem:[#allocation8 + $0x4] sm:$0xf]
          %v489 = vld [vmem:[#allocation8 + $0x8] sm:$0xf]
          %v490 = vld [vmem:[#allocation8 + $0xc] sm:$0xf]
          %v491 = vld [vmem:[#allocation8 + $0x10] sm:$0xf]
          %v492 = vld [vmem:[#allocation8 + $0x14] sm:$0xf]
          %v493 = vld [vmem:[#allocation8 + $0x18] sm:$0xf]
          %v494 = vld [vmem:[#allocation8 + $0x1c] sm:$0xf]
          %v495 = vld [vmem:[#allocation8 + $0x20] sm:$0xf]
          %v496 = vld [vmem:[#allocation8 + $0x24] sm:$0xf]
          %v497 = vld [vmem:[#allocation8 + $0x28] sm:$0xf]
          %v498 = vld [vmem:[#allocation8 + $0x2c] sm:$0xf]
          %v499 = vld [vmem:[#allocation8 + $0x30] sm:$0xf]
          %v500 = vld [vmem:[#allocation8 + $0x34] sm:$0xf]
          %v501 = vld [vmem:[#allocation8 + $0x38] sm:$0xf]
          %v502 = vld [vmem:[#allocation8 + $0x3c] sm:$0xf]
          %v519 = vunpack.c.l.b16 %v487
          %v520 = vunpack.c.l.b16 %v488
          %v521 = vunpack.c.l.b16 %v489
          %v522 = vunpack.c.l.b16 %v490
          %v523 = vunpack.c.l.b16 %v491
          %v524 = vunpack.c.l.b16 %v492
          %v525 = vunpack.c.l.b16 %v493
          %v526 = vunpack.c.l.b16 %v494
          %v527 = vunpack.c.l.b16 %v495
          %v528 = vunpack.c.l.b16 %v496
          %v529 = vunpack.c.l.b16 %v497
          %v530 = vunpack.c.l.b16 %v498
          %v531 = vunpack.c.l.b16 %v499
          %v532 = vunpack.c.l.b16 %v500
          %v533 = vunpack.c.l.b16 %v501
          %v534 = vunpack.c.l.b16 %v502
          %v535 = vpack.c.b16 %v520, %v519
          %v536 = vpack.c.b16 %v522, %v521
          %v537 = vpack.c.b16 %v524, %v523
          %v538 = vpack.c.b16 %v526, %v525
          %v539 = vpack.c.b16 %v528, %v527
          %v540 = vpack.c.b16 %v530, %v529
          %v541 = vpack.c.b16 %v532, %v531
          %v542 = vpack.c.b16 %v534, %v533
          %551 = vmatpush.bf16.msra.mxu0 %v542
          %552 = vmatpush.bf16.msra.mxu0 %v541
          %553 = vmatpush.bf16.msra.mxu0 %v540
          %554 = vmatpush.bf16.msra.mxu0 %v539
          %555 = vmatpush.bf16.msra.mxu0 %v538
          %556 = vmatpush.bf16.msra.mxu0 %v537
          %557 = vmatpush.bf16.msra.mxu0 %v536
          %558 = vmatpush.bf16.msra.mxu0 %v535
          %559 = vmatmul.bf16.gmra.mxu0 %v486
          %v560 = vpop.f32.mrf.mxu0
          %v561 = vadd.f32 0.0, %v560
          %v562 = vpop.f32.mrf.mxu0
          %563 = vdwg.mxu0
          %v580 = vunpack.c.l.b16 %v470
          %v581 = vunpack.c.l.b16 %v471
          %v582 = vunpack.c.l.b16 %v472
          %v583 = vunpack.c.l.b16 %v473
          %v584 = vunpack.c.l.b16 %v474
          %v585 = vunpack.c.l.b16 %v475
          %v586 = vunpack.c.l.b16 %v476
          %v587 = vunpack.c.l.b16 %v477
          %v588 = vunpack.c.l.b16 %v478
          %v589 = vunpack.c.l.b16 %v479
          %v590 = vunpack.c.l.b16 %v480
          %v591 = vunpack.c.l.b16 %v481
          %v592 = vunpack.c.l.b16 %v482
          %v593 = vunpack.c.l.b16 %v483
          %v594 = vunpack.c.l.b16 %v484
          %v595 = vunpack.c.l.b16 %v485
          %v596 = vpack.c.b16 %v581, %v580
          %v597 = vpack.c.b16 %v583, %v582
          %v598 = vpack.c.b16 %v585, %v584
          %v599 = vpack.c.b16 %v587, %v586
          %v600 = vpack.c.b16 %v589, %v588
          %v601 = vpack.c.b16 %v591, %v590
          %v602 = vpack.c.b16 %v593, %v592
          %v603 = vpack.c.b16 %v595, %v594
          %612 = vmatpush.bf16.msra.mxu0 %v603
          %613 = vmatpush.bf16.msra.mxu0 %v602
          %614 = vmatpush.bf16.msra.mxu0 %v601
          %615 = vmatpush.bf16.msra.mxu0 %v600
          %616 = vmatpush.bf16.msra.mxu0 %v599
          %617 = vmatpush.bf16.msra.mxu0 %v598
          %618 = vmatpush.bf16.msra.mxu0 %v597
          %619 = vmatpush.bf16.msra.mxu0 %v596
          %620 = vmatmul.bf16.gmra.mxu0 %v469
          %v621 = vpop.f32.mrf.mxu0
          %v622 = vadd.f32 %v561, %v621
          %v623 = vpop.f32.mrf.mxu0
          %624 = vdwg.mxu0
          %v625 = vmax.f32 %v622, 0.0
          %v626 = vmin.f32 %v625, 6.0
          %627 = vst [vmem:[%s346] sm:$0xff] %v626
        $region64: #{tpu_custom_call.1} parent=43 // pred_fallthru
          _
        %s628 = sand.u32 %s190, 1
        %s629 = scalar_lea.sflag [#allocation5], %s628
        %s630 = sand.u32 %s190, 1
        %s631 = smul.addr %s630, 8
        %s632 = scalar_lea.vmem [#allocation9], %s631
        // Predicated region
        $region65: #{tpu_custom_call.1} parent=43 // pred_check
          %p633 = pneg %p200
        $region66: #{tpu_custom_call.1} parent=43 // pred_check_branch
          %635 = sbr.rel (%p633) target = $region68
        $region67: #{tpu_custom_call.1} parent=43 // pred_region
          %637 = vsyncadd %s629, 0
          %s638 = smul.addr %s26, 8
          %s639 = scalar_lea.hbm %s6, %s638
          %s641 = sshll.u32 %s632, 4
          %s642 = int_to_ptr.vmem [resolvable:$true] %s641
          %s643 = sshll.u32 %s639, 4
          %s644 = int_to_ptr.hbm [resolvable:$true] %s643
          %646 = dma.vmem_to_hbm [thread:$0]  %s642, 128, %s644, %s629
        $region68: #{tpu_custom_call.1} parent=43 // pred_fallthru
          _
      $region44: #{tpu_custom_call.1} parent=5 // pred_fallthru
        _
      %p647 = scmp.le.s32.totalorder 2, %s17
      // Predicated region
      $region69: #{tpu_custom_call.1} parent=5 // pred_check
        %p648 = pneg %p647
      $region70: #{tpu_custom_call.1} parent=5 // pred_check_branch
        %650 = sbr.rel (%p648) target = $region72
      $region71: #{tpu_custom_call.1} parent=5 // pred_region
        %s651 = ssub.s32 %s17, 2
        // Predicated region
        $region73: #{tpu_custom_call.1} parent=71 // pred_check
          %p652 = pneg %p206
        $region74: #{tpu_custom_call.1} parent=71 // pred_check_branch
          %654 = sbr.rel (%p652) target = $region76
        $region75: #{tpu_custom_call.1} parent=71 // pred_region
          %s655 = sand.u32 %s191, 1
          %s656 = scalar_lea.sflag [#allocation5], %s655
          %s657 = sand.u32 %s191, 1
          %s658 = smul.addr %s657, 8
          %s659 = scalar_lea.vmem [#allocation9], %s658
          %661 = dma.done %s656, 128
        $region76: #{tpu_custom_call.1} parent=71 // pred_fallthru
          _
      $region72: #{tpu_custom_call.1} parent=5 // pred_fallthru
        _
    $region6: #{tpu_custom_call.1} parent=1 // loop_footer
      %s21 = sadd.s32 1, %s17
    $region7: #{tpu_custom_call.1} parent=1 // loop_footer_branch
      %16 = sbr.rel target = $region3
    $region8: #{tpu_custom_call.1} parent=1 // loop_exit
      _
    %662 = vsyncpa [#allocation4], 1
    %s663 = scalar_lea.sflag [#allocation4], 1
    %664 = vsyncpa %s663, 1
    %665 = vsyncpa [#allocation7], 1
    %666 = vsyncpa [#allocation5], 1
    %s667 = scalar_lea.sflag [#allocation5], 1
    %668 = vsyncpa %s667, 1

</llo_original>
